<compile_context>
chip_gen: v7x
topology: tpu7x:2x2x1
jax: 0.10.0
libtpu: 0.0.40
codegen_flags: <defaults>
</compile_context>

<pallas_src>
import jax
import jax.numpy as jnp
import numpy as np
from jax.experimental import pallas as pl
from jax.experimental.pallas import tpu as pltpu


def _round_up(n, m):
    return ((n + m - 1) // m) * m


def _length_regulator_kernel(start_ref, cum_ref, x_ref, out_ref):
    # start_ref/cum_ref: (1, 1, Tp) int32   x_ref: (1, Tp, Hp)   out_ref: (1, TM, Hp)
    tm = out_ref.shape[1]
    tp = x_ref.shape[1]
    dtype = x_ref.dtype

    # Global output-frame index for this M tile.
    m0 = pl.program_id(1) * tm
    pos = m0 + jax.lax.broadcasted_iota(jnp.int32, (tm, tp), 0)     # (TM, Tp)

    start = start_ref[0]                                            # (1, Tp)
    cum = cum_ref[0]                                                # (1, Tp)

    # One-hot rows: W[j, i] = 1 iff start[i] <= j < cum[i].  Since start <= cum,
    # (pos < cum) - (pos < start) is exactly that indicator (0/1 in x.dtype).
    # Rows past the total duration are all-zero -> zero padding; rows >= max_len
    # are never stored.
    w = (pos < cum).astype(dtype) - (pos < start).astype(dtype)     # (TM, Tp)

    # Gather-by-matmul on the MXU with fp32 accumulation.
    out = jnp.dot(w, x_ref[0], preferred_element_type=jnp.float32)  # (TM, Hp)
    out_ref[0] = out.astype(out_ref.dtype)


def length_regulator(x, duration, max_len, *, tile_m=256):
    """x: (B, T, H) float, duration: (B, T) int, max_len: static int.

    Returns (output, mel_pos) matching LengthRegulator.forward.
    """
    B, T, H = x.shape

    # Hoisted once-per-batch scan.
    dur = jnp.maximum(duration.astype(jnp.int32), 0)   # matches max(int(size), 0)
    cum = jnp.cumsum(dur, axis=-1)                     # exclusive end per source frame
    start = cum - dur                                  # inclusive start per source frame

    # Pad T (MXU K dim) to a multiple of 128. Padded columns get an empty
    # [start, cum) interval (start == cum == total) -> all-zero W columns.
    Tp = _round_up(max(T, 128), 128)
    if Tp != T:
        total = cum[:, -1:]
        cum = jnp.concatenate([cum, jnp.broadcast_to(total, (B, Tp - T))], axis=-1)
        start = jnp.concatenate([start, jnp.broadcast_to(total, (B, Tp - T))], axis=-1)
        x = jnp.pad(x, ((0, 0), (0, Tp - T), (0, 0)))

    # Pad H to a multiple of 128: lane-dense, unmasked vector stores.
    Hp = _round_up(max(H, 128), 128)
    if Hp != H:
        x = jnp.pad(x, ((0, 0), (0, 0), (0, Hp - H)))

    # Tile max_len into a parallel grid axis.
    tm = min(tile_m, _round_up(max_len, 8))
    Mp = _round_up(max_len, tm)
    n_m = Mp // tm

    # Explicit VMEM budget: double-buffered inputs/outputs + in-kernel W / f32 result.
    x_bytes = x.dtype.itemsize
    vmem_needed = (
        2 * 2 * (Tp * 4)            # start / cum tiles, double buffered
        + 2 * (Tp * Hp * x_bytes)   # x tile, double buffered
        + 2 * (tm * Hp * x_bytes)   # out tile, double buffered
        + tm * Tp * x_bytes         # W
        + tm * Hp * 4               # f32 matmul result
    )
    vmem_limit = int(min(64 * 1024 * 1024, max(4 * 1024 * 1024, 2 * vmem_needed)))

    out = pl.pallas_call(
        _length_regulator_kernel,
        out_shape=jax.ShapeDtypeStruct((B, Mp, Hp), x.dtype),
        grid_spec=pltpu.PrefetchScalarGridSpec(
            num_scalar_prefetch=0,
            grid=(B, n_m),
            in_specs=[
                pl.BlockSpec((1, 1, Tp), lambda b, m: (b, 0, 0)),
                pl.BlockSpec((1, 1, Tp), lambda b, m: (b, 0, 0)),
                pl.BlockSpec((1, Tp, Hp), lambda b, m: (b, 0, 0)),
            ],
            out_specs=pl.BlockSpec((1, tm, Hp), lambda b, m: (b, m, 0)),
        ),
        compiler_params=pltpu.CompilerParams(
            dimension_semantics=("parallel", "parallel"),
            vmem_limit_bytes=vmem_limit),
    )(start.reshape(B, 1, Tp), cum.reshape(B, 1, Tp), x)

    out = out[:, :max_len, :H]

    # Glue (plain JAX): mel_pos only depends on max_len.
    # TODO(synk): torch.LongTensor is int64; int32 used here (JAX default, no x64).
    mel_pos = jnp.arange(1, max_len + 1, dtype=jnp.int32)[None, :]
    return out, mel_pos


def _reference_numpy(x, duration, max_len):
    """Pure-numpy replica of LengthRegulator.LR + pad for correctness checking."""
    B, T, H = x.shape
    out = np.zeros((B, max_len, H), dtype=np.float32)
    x = np.asarray(x, dtype=np.float32)
    for b in range(B):
        reps = np.maximum(duration[b], 0).astype(np.int64)
        expanded = np.repeat(x[b], reps, axis=0)
        n = min(expanded.shape[0], max_len)
        out[b, :n] = expanded[:n]
    mel_pos = np.arange(1, max_len + 1, dtype=np.int32)[None, :]
    return out, mel_pos


if __name__ == "__main__":
    key = jax.random.PRNGKey(0)
    kx, kd = jax.random.split(key)

    B, T, H = 2, 8, 32
    MAX_LEN = 24

    x = jax.random.normal(kx, (B, T, H), dtype=jnp.float32)
    duration = jax.random.randint(kd, (B, T), minval=0, maxval=4, dtype=jnp.int32)

    # fp32 path (bit-exact expected: one-hot fp32 matmul).
    out, mel_pos = length_regulator(x, duration, MAX_LEN)
    out = jax.block_until_ready(out)
    mel_pos = jax.block_until_ready(mel_pos)

    ref_out, ref_pos = _reference_numpy(np.asarray(x), np.asarray(duration), MAX_LEN)
    np.testing.assert_allclose(np.asarray(out), ref_out, rtol=1e-6, atol=1e-6)
    np.testing.assert_array_equal(np.asarray(mel_pos), ref_pos)

    # bf16 path (exact as well: each output row copies exactly one source row).
    x_bf16 = x.astype(jnp.bfloat16)
    out_bf16, _ = length_regulator(x_bf16, duration, MAX_LEN)
    out_bf16 = jax.block_until_ready(out_bf16)
    ref_bf16, _ = _reference_numpy(np.asarray(x_bf16, dtype=np.float32),
                                   np.asarray(duration), MAX_LEN)
    np.testing.assert_array_equal(np.asarray(out_bf16, dtype=np.float32), ref_bf16)

    print("KERNEL_OK")
</pallas_src>

<mosaic_0001>
module attributes {stable_mosaic.version = 11 : i64} {
  func.func @_length_regulator_kernel(%arg0: i32, %arg1: i32, %arg2: memref<1x1x128xi32, #tpu.memory_space<vmem>>, %arg3: memref<1x1x128xi32, #tpu.memory_space<vmem>>, %arg4: memref<1x128x128xf32, #tpu.memory_space<vmem>>, %arg5: memref<1x24x128xf32, #tpu.memory_space<vmem>>) attributes {dimension_semantics = [#tpu.dimension_semantics<parallel>, #tpu.dimension_semantics<parallel>], iteration_bounds = array<i64: 2, 1>, scalar_prefetch = 0 : i64, scratch_operands = 0 : i64, tpu.core_type = #tpu.core_type<tc>, window_params = [{transform_indices = @transform_0, window_bounds = array<i64: 1, 1, 128>}, {transform_indices = @transform_1, window_bounds = array<i64: 1, 1, 128>}, {transform_indices = @transform_2, window_bounds = array<i64: 1, 128, 128>}, {transform_indices = @transform_3, window_bounds = array<i64: 1, 24, 128>}]} {
    %c24_i32 = arith.constant 24 : i32
    %0 = arith.muli %arg1, %c24_i32 : i32
    %1 = tpu.iota {dimensions = array<i32: 0>} : vector<24x128xi32>
    %2 = vector.broadcast %0 : i32 to vector<24x128xi32>
    %3 = arith.addi %2, %1 : vector<24x128xi32>
    %c0 = arith.constant 0 : index
    %c0_0 = arith.constant 0 : index
    %c0_1 = arith.constant 0 : index
    %4 = vector.load %arg2[%c0, %c0_0, %c0_1] : memref<1x1x128xi32, #tpu.memory_space<vmem>>, vector<1x1x128xi32>
    %5 = vector.shape_cast %4 : vector<1x1x128xi32> to vector<1x128xi32>
    %c0_2 = arith.constant 0 : index
    %c0_3 = arith.constant 0 : index
    %c0_4 = arith.constant 0 : index
    %6 = vector.load %arg3[%c0_2, %c0_3, %c0_4] : memref<1x1x128xi32, #tpu.memory_space<vmem>>, vector<1x1x128xi32>
    %7 = vector.shape_cast %6 : vector<1x1x128xi32> to vector<1x128xi32>
    %8 = vector.broadcast %7 : vector<1x128xi32> to vector<24x128xi32>
    %9 = arith.cmpi slt, %3, %8 : vector<24x128xi32>
    %10 = arith.extui %9 : vector<24x128xi1> to vector<24x128xi32>
    %11 = arith.sitofp %10 : vector<24x128xi32> to vector<24x128xf32>
    %12 = vector.broadcast %5 : vector<1x128xi32> to vector<24x128xi32>
    %13 = arith.cmpi slt, %3, %12 : vector<24x128xi32>
    %14 = arith.extui %13 : vector<24x128xi1> to vector<24x128xi32>
    %15 = arith.sitofp %14 : vector<24x128xi32> to vector<24x128xf32>
    %16 = arith.subf %11, %15 : vector<24x128xf32>
    %c0_5 = arith.constant 0 : index
    %c0_6 = arith.constant 0 : index
    %c0_7 = arith.constant 0 : index
    %17 = vector.load %arg4[%c0_5, %c0_6, %c0_7] : memref<1x128x128xf32, #tpu.memory_space<vmem>>, vector<1x128x128xf32>
    %18 = vector.shape_cast %17 : vector<1x128x128xf32> to vector<128x128xf32>
    %cst = arith.constant dense<0.000000e+00> : vector<24x128xf32>
    %19 = tpu.matmul %16, %18, %cst {dimension_numbers = #tpu.dot_dimension_numbers<[1], [0], [0], [1], [0, 0, 1, 1], [], []>} : vector<24x128xf32>, vector<128x128xf32>, vector<24x128xf32> -> vector<24x128xf32>
    %c0_8 = arith.constant 0 : index
    %c0_9 = arith.constant 0 : index
    %c0_10 = arith.constant 0 : index
    %20 = vector.load %arg5[%c0_8, %c0_9, %c0_10] : memref<1x24x128xf32, #tpu.memory_space<vmem>>, vector<1x24x128xf32>
    %21 = vector.shape_cast %20 : vector<1x24x128xf32> to vector<24x128xf32>
    %22 = vector.shape_cast %19 : vector<24x128xf32> to vector<1x24x128xf32>
    tpu.vector_store %arg5[%c0_8, %c0_9, %c0_10], %22 {strides = array<i32>} : memref<1x24x128xf32, #tpu.memory_space<vmem>>, vector<1x24x128xf32>,
    return
  }
  func.func @transform_0(%arg0: i32, %arg1: i32) -> (i32, i32, i32) {
    %c0_i32 = arith.constant 0 : i32
    %c0_i32_0 = arith.constant 0 : i32
    %c0_i32_1 = arith.constant 0 : i32
    return %arg0, %c0_i32, %c0_i32_0 : i32, i32, i32
  }
  func.func @transform_1(%arg0: i32, %arg1: i32) -> (i32, i32, i32) {
    %c0_i32 = arith.constant 0 : i32
    %c0_i32_0 = arith.constant 0 : i32
    %c0_i32_1 = arith.constant 0 : i32
    return %arg0, %c0_i32, %c0_i32_0 : i32, i32, i32
  }
  func.func @transform_2(%arg0: i32, %arg1: i32) -> (i32, i32, i32) {
    %c0_i32 = arith.constant 0 : i32
    %c0_i32_0 = arith.constant 0 : i32
    %c0_i32_1 = arith.constant 0 : i32
    return %arg0, %c0_i32, %c0_i32_0 : i32, i32, i32
  }
  func.func @transform_3(%arg0: i32, %arg1: i32) -> (i32, i32, i32) {
    %c0_i32 = arith.constant 0 : i32
    %c0_i32_0 = arith.constant 0 : i32
    return %arg0, %arg1, %c0_i32 : i32, i32, i32
  }
}

</mosaic_0001>

<llo_original>
// kernel: tpu_custom_call.1
$region0: #{tpu_custom_call.1}
  #allocation0 [shape = 'u32[]', space=smem, size = 0x4, offset = 0x4, fixed_abs, tag = 'smem constant byte address 0x4 - core index']
  #allocation1 [shape = 'u32[144,128]{1,0:T(1,128)}', space=vmem, size = 0x12000, scoped, tag = 'internal scratch']
  %s0 = inlined_call_operand.hbm [shape: s32[2,1,128], index: 0, kind: input, shape index: {}]
  %s1 = inlined_call_operand.vmem [shape: s32[2,1,128], index: 1, kind: input, shape index: {}]
  %s2 = inlined_call_operand.hbm [shape: f32[2,128,128], index: 2, kind: input, shape index: {}]
  %s3 = inlined_call_operand.hbm [shape: f32[2,24,128], index: 3, kind: output, shape index: {}]
  %s4 = sld [smem:[#allocation0]]
  $region53: #{tpu_custom_call.1} parent=0
    _
  %s6 = ssub.s32 1, %s4
  %s7 = scalar_select 0, %s6, %s4
  $region1: #{tpu_custom_call.1} parent=0
    #allocation2 [shape = 'u8[1024]{0}', space=vmem, size = 0x400, scoped, tag = 'input window, operand 0']
    #allocation3 [shape = 's32[2]{0}', space=sflag, size = 0x8, scoped, tag = 'scoped memory for tpu_custom_call.1']
    #allocation4 [shape = 's32[2]{0}', space=sflag, size = 0x8, scoped, tag = 'scoped memory for tpu_custom_call.1']
    #allocation5 [shape = 'u8[131072]{0}', space=vmem, size = 0x20000, scoped, tag = 'input window, operand 2']
    #allocation6 [shape = 's32[2]{0}', space=sflag, size = 0x8, scoped, tag = 'scoped memory for tpu_custom_call.1']
    #allocation7 [shape = 'u8[24576]{0}', space=vmem, size = 0x6000, scoped, tag = 'output window, operand 0']
    %8 = vsyncpa [#allocation3], 0
    %s9 = scalar_lea.sflag [#allocation3], 1
    %10 = vsyncpa %s9, 0
    %11 = vsyncpa [#allocation6], 0
    %s12 = scalar_lea.sflag [#allocation6], 1
    %13 = vsyncpa %s12, 0
    %14 = vsyncpa [#allocation4], 0
    %s15 = scalar_lea.sflag [#allocation4], 1
    %16 = vsyncpa %s15, 0
    loop: start=0, step=1, limit=4
    $region2: #{tpu_custom_call.1} parent=1 // loop_pre_header
      _
    $region3: #{tpu_custom_call.1} parent=1 // loop_header
      %s18 = sphi 0, %s22
      %p19 = scmp.ge.s32.totalorder %s18, 4
      %s25 = sphi 0, %s37
      %s26 = sphi 0, %s33
      %s27 = sphi 0, %s25
      %s28 = sphi 0, %s26
      %s29 = sphi 0, %s27
      %s30 = sphi 0, %s28
      %s40 = sphi 0, %s42
      %s43 = sphi 0, %s40
      %s44 = sphi 0, %s43
      %s60 = sphi 0, %s44
      %s66 = sphi 0, %s68
      %s69 = sphi 0, %s66
      %s70 = sphi 0, %s69
      %s86 = sphi 0, %s70
      %s92 = sphi 0, %s94
      %s95 = sphi 0, %s92
      %s96 = sphi 0, %s95
      %s112 = sphi 0, %s96
      %s120 = sphi 0, %s122
      %s123 = sphi 0, %s120
      %s124 = sphi 0, %s123
      %s140 = sphi 0, %s124
    $region4: #{tpu_custom_call.1} parent=1 // loop_header_branch
      %21 = sbr.rel (%p19) target = $region8
    $region5: #{tpu_custom_call.1} parent=1 // loop_body
      %s23 = ssub.s32 %s18, 1
      %s24 = ssub.s32 %s18, 2
      %s31 = sadd.s32 1, %s26
      %p32 = scmp.ge.s32.totalorder %s31, 1
      %s33 = scalar_select %p32, 0, %s31
      %s34 = sadd.s32 1, %s25
      %s35 = scalar_select %p32, %s34, %s25
      %p36 = scmp.ge.s32.totalorder %s35, 2
      %s37 = scalar_select %p36, 0, %s35
      %s38 = ssub.s32 %s25, %s37
      %p39 = scmp.eq.s32.totalorder %s38, 0
      %s41 = sadd.s32 %s40, 1
      %s42 = scalar_select %p39, %s40, %s41
      %p45 = pneg %p39
      %p46 = scmp.eq.s32.totalorder %s18, 1
      %p47 = por %p45, %p46
      %p48 = scmp.ne.s32.totalorder %s40, %s43
      %p49 = scmp.eq.s32.totalorder %s18, 0
      %p50 = por %p48, %p49
      %p51 = scmp.ne.s32.totalorder %s40, %s43
      %p52 = scmp.eq.s32.totalorder %s23, 1
      %p53 = por %p51, %p52
      %p54 = scmp.ne.s32.totalorder %s43, %s44
      %p55 = scmp.eq.s32.totalorder %s23, 0
      %p56 = por %p54, %p55
      %p57 = scmp.ne.s32.totalorder %s43, %s44
      %p58 = scmp.eq.s32.totalorder %s24, 1
      %p59 = por %p57, %p58
      %p61 = scmp.ne.s32.totalorder %s44, %s60
      %p62 = scmp.eq.s32.totalorder %s24, 0
      %p63 = por %p61, %p62
      %s64 = ssub.s32 %s25, %s37
      %p65 = scmp.eq.s32.totalorder %s64, 0
      %s67 = sadd.s32 %s66, 1
      %s68 = scalar_select %p65, %s66, %s67
      %p71 = pneg %p65
      %p72 = scmp.eq.s32.totalorder %s18, 1
      %p73 = por %p71, %p72
      %p74 = scmp.ne.s32.totalorder %s66, %s69
      %p75 = scmp.eq.s32.totalorder %s18, 0
      %p76 = por %p74, %p75
      %p77 = scmp.ne.s32.totalorder %s66, %s69
      %p78 = scmp.eq.s32.totalorder %s23, 1
      %p79 = por %p77, %p78
      %p80 = scmp.ne.s32.totalorder %s69, %s70
      %p81 = scmp.eq.s32.totalorder %s23, 0
      %p82 = por %p80, %p81
      %p83 = scmp.ne.s32.totalorder %s69, %s70
      %p84 = scmp.eq.s32.totalorder %s24, 1
      %p85 = por %p83, %p84
      %p87 = scmp.ne.s32.totalorder %s70, %s86
      %p88 = scmp.eq.s32.totalorder %s24, 0
      %p89 = por %p87, %p88
      %s90 = ssub.s32 %s25, %s37
      %p91 = scmp.eq.s32.totalorder %s90, 0
      %s93 = sadd.s32 %s92, 1
      %s94 = scalar_select %p91, %s92, %s93
      %p97 = pneg %p91
      %p98 = scmp.eq.s32.totalorder %s18, 1
      %p99 = por %p97, %p98
      %p100 = scmp.ne.s32.totalorder %s92, %s95
      %p101 = scmp.eq.s32.totalorder %s18, 0
      %p102 = por %p100, %p101
      %p103 = scmp.ne.s32.totalorder %s92, %s95
      %p104 = scmp.eq.s32.totalorder %s23, 1
      %p105 = por %p103, %p104
      %p106 = scmp.ne.s32.totalorder %s95, %s96
      %p107 = scmp.eq.s32.totalorder %s23, 0
      %p108 = por %p106, %p107
      %p109 = scmp.ne.s32.totalorder %s95, %s96
      %p110 = scmp.eq.s32.totalorder %s24, 1
      %p111 = por %p109, %p110
      %p113 = scmp.ne.s32.totalorder %s96, %s112
      %p114 = scmp.eq.s32.totalorder %s24, 0
      %p115 = por %p113, %p114
      %s116 = ssub.s32 %s25, %s37
      %s117 = ssub.s32 %s26, %s33
      %s118 = sor.u32 %s116, %s117
      %p119 = scmp.eq.s32.totalorder %s118, 0
      %s121 = sadd.s32 %s120, 1
      %s122 = scalar_select %p119, %s120, %s121
      %p125 = pneg %p119
      %p126 = scmp.eq.s32.totalorder %s18, 1
      %p127 = por %p125, %p126
      %p128 = scmp.ne.s32.totalorder %s120, %s123
      %p129 = scmp.eq.s32.totalorder %s18, 0
      %p130 = por %p128, %p129
      %p131 = scmp.ne.s32.totalorder %s120, %s123
      %p132 = scmp.eq.s32.totalorder %s23, 1
      %p133 = por %p131, %p132
      %p134 = scmp.ne.s32.totalorder %s123, %s124
      %p135 = scmp.eq.s32.totalorder %s23, 0
      %p136 = por %p134, %p135
      %p137 = scmp.ne.s32.totalorder %s123, %s124
      %p138 = scmp.eq.s32.totalorder %s24, 1
      %p139 = por %p137, %p138
      %p141 = scmp.ne.s32.totalorder %s124, %s140
      %p142 = scmp.eq.s32.totalorder %s24, 0
      %p143 = por %p141, %p142
      %p144 = scmp.le.s32.totalorder 1, %s18
      %p145 = scmp.lt.s32.totalorder %s18, 3
      %p146 = pnand %p144, %p145
      %p147 = pneg %p146
      // Predicated region
      $region9: #{tpu_custom_call.1} parent=5 // pred_check
        _
      $region10: #{tpu_custom_call.1} parent=5 // pred_check_branch
        %149 = sbr.rel (%p146) target = $region12
      $region11: #{tpu_custom_call.1} parent=5 // pred_region
        %s150 = ssub.s32 %s18, 1
      $region12: #{tpu_custom_call.1} parent=5 // pred_fallthru
        _
      %p151 = scmp.lt.s32.totalorder %s18, 2
      // Predicated region
      $region13: #{tpu_custom_call.1} parent=5 // pred_check
        %p152 = pneg %p151
      $region14: #{tpu_custom_call.1} parent=5 // pred_check_branch
        %154 = sbr.rel (%p152) target = $region16
      $region15: #{tpu_custom_call.1} parent=5 // pred_region
        // Predicated region
        $region17: #{tpu_custom_call.1} parent=15 // pred_check
          %p155 = pneg %p50
        $region18: #{tpu_custom_call.1} parent=15 // pred_check_branch
          %157 = sbr.rel (%p155) target = $region20
        $region19: #{tpu_custom_call.1} parent=15 // pred_region
          %s158 = sand.u32 %s40, 1
          %s159 = scalar_lea.sflag [#allocation3], %s158
          %s160 = sand.u32 %s40, 1
          %s161 = scalar_lea.vmem [#allocation2], %s160
          %s163 = ssub.s32 16, 16
          %164 = vsyncadd %s159, %s163
          %s165 = smul.addr %s25, 16
          %s166 = scalar_lea.hbm %s0, %s165
          %s168 = sshll.u32 %s161, 4
          %s169 = int_to_ptr.vmem [resolvable:$true] %s168
          %171 = dma.hbm_to_vmem [thread:$0]  %s166, 16, %s169, %s159
        $region20: #{tpu_custom_call.1} parent=15 // pred_fallthru
          _
        // Predicated region
        $region21: #{tpu_custom_call.1} parent=15 // pred_check
          %p172 = pneg %p76
        $region22: #{tpu_custom_call.1} parent=15 // pred_check_branch
          %174 = sbr.rel (%p172) target = $region24
        $region23: #{tpu_custom_call.1} parent=15 // pred_region
          %p175 = scmp.lt.s32.totalorder %s25, 1
          %s176 = scalar_select %p175, %s25, 1
          %s177 = scalar_lea.vmem %s1, %s176
        $region24: #{tpu_custom_call.1} parent=15 // pred_fallthru
          _
        // Predicated region
        $region25: #{tpu_custom_call.1} parent=15 // pred_check
          %p178 = pneg %p102
        $region26: #{tpu_custom_call.1} parent=15 // pred_check_branch
          %180 = sbr.rel (%p178) target = $region28
        $region27: #{tpu_custom_call.1} parent=15 // pred_region
          %s181 = sand.u32 %s92, 1
          %s182 = scalar_lea.sflag [#allocation6], %s181
          %s183 = sand.u32 %s92, 1
          %s184 = smul.addr %s183, 128
          %s185 = scalar_lea.vmem [#allocation5], %s184
          %s187 = ssub.s32 2048, 2048
          %188 = vsyncadd %s182, %s187
          %s189 = smul.addr %s25, 16
          %s190 = smul.addr %s189, 128
          %s191 = scalar_lea.hbm %s2, %s190
          %s192 = sshll.u32 %s185, 4
          %s193 = int_to_ptr.vmem [resolvable:$true] %s192
          %198 = dma.hbm_to_vmem [thread:$0]  %s191, 2048, %s193, %s182, 128, 128, 8
        $region28: #{tpu_custom_call.1} parent=15 // pred_fallthru
          _
      $region16: #{tpu_custom_call.1} parent=5 // pred_fallthru
        _
      %p199 = scmp.le.s32.totalorder 1, %s18
      %p200 = scmp.lt.s32.totalorder %s18, 3
      %p201 = pnand %p199, %p200
      %p202 = pneg %p201
      // Predicated region
      $region29: #{tpu_custom_call.1} parent=5 // pred_check
        _
      $region30: #{tpu_custom_call.1} parent=5 // pred_check_branch
        %204 = sbr.rel (%p201) target = $region32
      $region31: #{tpu_custom_call.1} parent=5 // pred_region
        %s205 = ssub.s32 %s18, 1
        %s206 = sand.u32 %s43, 1
        %s207 = scalar_lea.sflag [#allocation3], %s206
        %s208 = sand.u32 %s43, 1
        %s209 = scalar_lea.vmem [#allocation2], %s208
        // Predicated region
        $region33: #{tpu_custom_call.1} parent=31 // pred_check
          %p210 = pneg %p56
        $region34: #{tpu_custom_call.1} parent=31 // pred_check_branch
          %212 = sbr.rel (%p210) target = $region36
        $region35: #{tpu_custom_call.1} parent=31 // pred_region
          %213 = dma.done %s207, 16
        $region36: #{tpu_custom_call.1} parent=31 // pred_fallthru
          _
        %s214 = sand.u32 %s95, 1
        %s215 = scalar_lea.sflag [#allocation6], %s214
        %s216 = sand.u32 %s95, 1
        %s217 = smul.addr %s216, 128
        %s218 = scalar_lea.vmem [#allocation5], %s217
        // Predicated region
        $region37: #{tpu_custom_call.1} parent=31 // pred_check
          %p219 = pneg %p108
        $region38: #{tpu_custom_call.1} parent=31 // pred_check_branch
          %221 = sbr.rel (%p219) target = $region40
        $region39: #{tpu_custom_call.1} parent=31 // pred_region
          %222 = dma.done %s215, 2048
        $region40: #{tpu_custom_call.1} parent=31 // pred_fallthru
          _
        %s223 = sand.u32 %s43, 1
        %s224 = scalar_lea.sflag [#allocation3], %s223
        %s225 = sand.u32 %s43, 1
        %s226 = scalar_lea.vmem [#allocation2], %s225
        %p227 = pneg %p56
        %p228 = pneg %p53
        %p229 = scmp.lt.s32.totalorder %s27, 1
        %s230 = scalar_select %p229, %s27, 1
        %s231 = scalar_lea.vmem %s1, %s230
        %p232 = pneg %p82
        %p233 = pneg %p79
        %s234 = sand.u32 %s95, 1
        %s235 = scalar_lea.sflag [#allocation6], %s234
        %s236 = sand.u32 %s95, 1
        %s237 = smul.addr %s236, 128
        %s238 = scalar_lea.vmem [#allocation5], %s237
        %p239 = pneg %p108
        %p240 = pneg %p105
        %p241 = pneg %p136
        %p242 = pneg %p133
        %s243 = sand.u32 %s123, 1
        %s244 = scalar_lea.sflag [#allocation4], %s243
        %s245 = sand.u32 %s123, 1
        %s246 = smul.addr %s245, 24
        %s247 = scalar_lea.vmem [#allocation7], %s246
        %p248 = scmp.lt.s32.totalorder %s27, 1
        %s249 = scalar_select %p248, %s27, 1
        %s250 = scalar_lea.vmem %s1, %s249
        %s251 = smul.u32 3, %s28
        %s252 = smul.u32 %s28, 24
        %v253 = vlaneseq
        %v254 = vshrl.u32 %v253, 7
        %v255 = vadd.s32 %v254, 8
        %v256 = vadd.s32 %v254, 16
        %v257 = vstv %s252
        %v258 = vadd.s32 %v257, %v254
        %v259 = vadd.s32 %v257, %v255
        %v260 = vadd.s32 %v257, %v256
        %v261 = vld [vmem:[%s209] sm:$0x1]
        %v262 = vld [vmem:[%s250] sm:$0x1]
        %v263 = vlaneseq
        %v264 = vshrl.u32 %v263, 7
        %v265 = vsub.s32 0, %v264
        %v266 = vrot.slane %v262, %v265
        %vm267 = vcmp.lt.s32.totalorder %v258, %v266
        %vm268 = vcmp.lt.s32.totalorder %v259, %v266
        %vm269 = vcmp.lt.s32.totalorder %v260, %v266
        %v270 = vsel %vm267, 1, 0
        %v271 = vsel %vm268, 1, 0
        %v272 = vsel %vm269, 1, 0
        %v273 = vcvt.s32.f32 %v270
        %v274 = vcvt.s32.f32 %v271
        %v275 = vcvt.s32.f32 %v272
        %v276 = vlaneseq
        %v277 = vshrl.u32 %v276, 7
        %v278 = vsub.s32 0, %v277
        %v279 = vrot.slane %v261, %v278
        %vm280 = vcmp.lt.s32.totalorder %v258, %v279
        %vm281 = vcmp.lt.s32.totalorder %v259, %v279
        %vm282 = vcmp.lt.s32.totalorder %v260, %v279
        %v283 = vsel %vm280, 1, 0
        %v284 = vsel %vm281, 1, 0
        %v285 = vsel %vm282, 1, 0
        %v286 = vcvt.s32.f32 %v283
        %v287 = vcvt.s32.f32 %v284
        %v288 = vcvt.s32.f32 %v285
        %v289 = vsub.f32 %v273, %v286
        %v290 = vsub.f32 %v274, %v287
        %v291 = vsub.f32 %v275, %v288
        %v292 = vld [vmem:[%s218] sm:$0xff]
        %v293 = vld [vmem:[%s218 + $0x8] sm:$0xff]
        %v294 = vld [vmem:[%s218 + $0x10] sm:$0xff]
        %v295 = vld [vmem:[%s218 + $0x18] sm:$0xff]
        %v296 = vld [vmem:[%s218 + $0x20] sm:$0xff]
        %v297 = vld [vmem:[%s218 + $0x28] sm:$0xff]
        %v298 = vld [vmem:[%s218 + $0x30] sm:$0xff]
        %v299 = vld [vmem:[%s218 + $0x38] sm:$0xff]
        %v300 = vld [vmem:[%s218 + $0x40] sm:$0xff]
        %v301 = vld [vmem:[%s218 + $0x48] sm:$0xff]
        %v302 = vld [vmem:[%s218 + $0x50] sm:$0xff]
        %v303 = vld [vmem:[%s218 + $0x58] sm:$0xff]
        %v304 = vld [vmem:[%s218 + $0x60] sm:$0xff]
        %v305 = vld [vmem:[%s218 + $0x68] sm:$0xff]
        %v306 = vld [vmem:[%s218 + $0x70] sm:$0xff]
        %v307 = vld [vmem:[%s218 + $0x78] sm:$0xff]
        %308 = vmatprep.subr.mxu0 0.0
        %309 = vmatpush1.msra.mxu0 %v292
        %310 = vmatprep.subr.mxu0 0.0
        %311 = vmatpush1.msra.mxu0 %v293
        %312 = vmatprep.subr.mxu0 0.0
        %313 = vmatpush1.msra.mxu0 %v294
        %314 = vmatprep.subr.mxu0 0.0
        %315 = vmatpush1.msra.mxu0 %v295
        %316 = vmatprep.subr.mxu0 0.0
        %317 = vmatpush1.msra.mxu0 %v296
        %318 = vmatprep.subr.mxu0 0.0
        %319 = vmatpush1.msra.mxu0 %v297
        %320 = vmatprep.subr.mxu0 0.0
        %321 = vmatpush1.msra.mxu0 %v298
        %322 = vmatprep.subr.mxu0 0.0
        %323 = vmatpush1.msra.mxu0 %v299
        %324 = vmatprep.subr.mxu0 0.0
        %325 = vmatpush1.msra.mxu0 %v300
        %326 = vmatprep.subr.mxu0 0.0
        %327 = vmatpush1.msra.mxu0 %v301
        %328 = vmatprep.subr.mxu0 0.0
        %329 = vmatpush1.msra.mxu0 %v302
        %330 = vmatprep.subr.mxu0 0.0
        %331 = vmatpush1.msra.mxu0 %v303
        %332 = vmatprep.subr.mxu0 0.0
        %333 = vmatpush1.msra.mxu0 %v304
        %334 = vmatprep.subr.mxu0 0.0
        %335 = vmatpush1.msra.mxu0 %v305
        %336 = vmatprep.subr.mxu0 0.0
        %337 = vmatpush1.msra.mxu0 %v306
        %338 = vmatprep.subr.mxu0 0.0
        %339 = vmatpush1.msra.mxu0 %v307
        %340 = vmatprep.subr.mxu0 0.0
        %341 = vmatpush1.msra.mxu0 0.0
        %342 = vmatprep.subr.mxu0 0.0
        %343 = vmatpush1.msra.mxu0 0.0
        %344 = vmatprep.subr.mxu0 0.0
        %345 = vmatpush1.msra.mxu0 0.0
        %346 = vmatprep.subr.mxu0 0.0
        %347 = vmatpush1.msra.mxu0 0.0
        %348 = vmatprep.subr.mxu0 0.0
        %349 = vmatpush1.msra.mxu0 0.0
        %350 = vmatprep.subr.mxu0 0.0
        %351 = vmatpush1.msra.mxu0 0.0
        %352 = vmatprep.subr.mxu0 0.0
        %353 = vmatpush1.msra.mxu0 0.0
        %354 = vmatprep.subr.mxu0 0.0
        %355 = vmatpush1.msra.mxu0 0.0
        %356 = vmatprep.subr.mxu0 0.0
        %357 = vmatpush1.msra.mxu0 0.0
        %358 = vmatprep.subr.mxu0 0.0
        %359 = vmatpush1.msra.mxu0 0.0
        %360 = vmatprep.subr.mxu0 0.0
        %361 = vmatpush1.msra.mxu0 0.0
        %362 = vmatprep.subr.mxu0 0.0
        %363 = vmatpush1.msra.mxu0 0.0
        %364 = vmatprep.subr.mxu0 0.0
        %365 = vmatpush1.msra.mxu0 0.0
        %366 = vmatprep.subr.mxu0 0.0
        %367 = vmatpush1.msra.mxu0 0.0
        %368 = vmatprep.subr.mxu0 0.0
        %369 = vmatpush1.msra.mxu0 0.0
        %370 = vmatprep.subr.mxu0 0.0
        %371 = vmatpush1.msra.mxu0 0.0
        %372 = vmatprep.mubr.f32.mxu0 0.0
        %373 = vmatmul.mubr.f32.gmra.mrb[0].mxu0 %v289
        %v374 = vpop.f32.mrb[0].mxu0
        %v375 = vadd.f32 0.0, %v374
        %v376 = vpop.f32.mrb[0].mxu0
        %377 = vmatprep.mubr.f32.mxu0 0.0
        %378 = vmatmul.mubr.f32.gmra.mrb[0].mxu0 %v290
        %v379 = vpop.f32.mrb[0].mxu0
        %v380 = vadd.f32 0.0, %v379
        %v381 = vpop.f32.mrb[0].mxu0
        %382 = vmatprep.mubr.f32.mxu0 0.0
        %383 = vmatmul.mubr.f32.gmra.mrb[0].mxu0 %v291
        %v384 = vpop.f32.mrb[0].mxu0
        %v385 = vadd.f32 0.0, %v384
        %v386 = vpop.f32.mrb[0].mxu0
        %387 = vdwg.mxu0
        %388 = vst [vmem:[%s247] sm:$0xff] %v375
        %389 = vst [vmem:[%s247 + $0x8] sm:$0xff] %v380
        %390 = vst [vmem:[%s247 + $0x10] sm:$0xff] %v385
        %s391 = sand.u32 %s123, 1
        %s392 = scalar_lea.sflag [#allocation4], %s391
        %s393 = sand.u32 %s123, 1
        %s394 = smul.addr %s393, 24
        %s395 = scalar_lea.vmem [#allocation7], %s394
        // Predicated region
        $region41: #{tpu_custom_call.1} parent=31 // pred_check
          %p396 = pneg %p133
        $region42: #{tpu_custom_call.1} parent=31 // pred_check_branch
          %398 = sbr.rel (%p396) target = $region44
        $region43: #{tpu_custom_call.1} parent=31 // pred_region
          %s399 = smul.u32 3, %s28
          %s401 = ssub.s32 384, 384
          %402 = vsyncadd %s392, %s401
          %s403 = smul.addr %s27, 3
          %s404 = sadd.s32 %s399, %s403
          %s405 = smul.addr %s404, 128
          %s406 = scalar_lea.hbm %s3, %s405
          %s407 = sshll.u32 %s395, 4
          %s408 = int_to_ptr.vmem [resolvable:$true] %s407
          %413 = dma.vmem_to_hbm [thread:$0]  %s408, 384, %s406, %s392, 128, 128, 8
        $region44: #{tpu_custom_call.1} parent=31 // pred_fallthru
          _
      $region32: #{tpu_custom_call.1} parent=5 // pred_fallthru
        _
      %p414 = scmp.le.s32.totalorder 2, %s18
      // Predicated region
      $region45: #{tpu_custom_call.1} parent=5 // pred_check
        %p415 = pneg %p414
      $region46: #{tpu_custom_call.1} parent=5 // pred_check_branch
        %417 = sbr.rel (%p415) target = $region48
      $region47: #{tpu_custom_call.1} parent=5 // pred_region
        %s418 = ssub.s32 %s18, 2
        // Predicated region
        $region49: #{tpu_custom_call.1} parent=47 // pred_check
          %p419 = pneg %p139
        $region50: #{tpu_custom_call.1} parent=47 // pred_check_branch
          %421 = sbr.rel (%p419) target = $region52
        $region51: #{tpu_custom_call.1} parent=47 // pred_region
          %s422 = sand.u32 %s124, 1
          %s423 = scalar_lea.sflag [#allocation4], %s422
          %s424 = sand.u32 %s124, 1
          %s425 = smul.addr %s424, 24
          %s426 = scalar_lea.vmem [#allocation7], %s425
          %427 = dma.done %s423, 384
        $region52: #{tpu_custom_call.1} parent=47 // pred_fallthru
          _
      $region48: #{tpu_custom_call.1} parent=5 // pred_fallthru
        _
    $region6: #{tpu_custom_call.1} parent=1 // loop_footer
      %s22 = sadd.s32 1, %s18
    $region7: #{tpu_custom_call.1} parent=1 // loop_footer_branch
      %17 = sbr.rel target = $region3
    $region8: #{tpu_custom_call.1} parent=1 // loop_exit
      _
    %428 = vsyncpa [#allocation3], 1
    %s429 = scalar_lea.sflag [#allocation3], 1
    %430 = vsyncpa %s429, 1
    %431 = vsyncpa [#allocation6], 1
    %s432 = scalar_lea.sflag [#allocation6], 1
    %433 = vsyncpa %s432, 1
    %434 = vsyncpa [#allocation4], 1
    %s435 = scalar_lea.sflag [#allocation4], 1
    %436 = vsyncpa %s435, 1

</llo_original>
